<compile_context>
chip_gen: v5e
topology: v5e:2x2
jax: 0.10.0
libtpu: 0.0.40
codegen_flags: <defaults>
</compile_context>

<pallas_src>
import functools

import jax
import jax.numpy as jnp
from jax.experimental import pallas as pl
from jax.experimental.pallas import tpu as pltpu

ALPHA = 0.95
TEMP = 6.0
_NEG_FILL = -1e9  # class-axis pad value: exp() underflows to exactly 0


def _round_up(x, m):
    return (x + m - 1) // m * m


def _distill_kernel(s_ref, t_ref, tgt_ref, kd_out, ce_out, kd_acc, ce_acc,
                    *, temp, n_rows, n_cols, n_inner):
    o = pl.program_id(0)   # outer ("parallel") row-tile group
    j = pl.program_id(1)   # inner ("arbitrary") row tile within the group

    @pl.when(j == 0)
    def _():
        kd_acc[...] = jnp.zeros_like(kd_acc)
        ce_acc[...] = jnp.zeros_like(ce_acc)

    s = s_ref[...].astype(jnp.float32)          # (TN, Cp) student logits
    tgt = tgt_ref[...]                          # (TN, 1) int32 labels
    tn, c_pad = s.shape
    inv_t = jnp.float32(1.0 / temp)

    # Row-validity mask (handles row padding when N doesn't divide the grid).
    row0 = (o * n_inner + j) * tn
    row_ids = row0 + jax.lax.broadcasted_iota(jnp.int32, (tn, 1), 0)
    valid = (row_ids < n_rows).astype(jnp.float32)             # (TN, 1)

    # ---- CE on raw student logits (first: keeps live (TN,C) temps short) ----
    s_max = jnp.max(s, axis=1, keepdims=True)                  # (TN, 1)
    s_shift = s - s_max                                        # (TN, Cp)
    log_z = jnp.log(jnp.sum(jnp.exp(s_shift), axis=1, keepdims=True))
    cls = jax.lax.broadcasted_iota(jnp.int32, (tn, c_pad), 1)
    picked = jnp.sum(jnp.where(cls == tgt, s_shift, 0.0),
                     axis=1, keepdims=True)                    # (TN, 1)
    ce_rows = (log_z - picked) * valid
    # accumulate already-normalized (mean-over-N) partials -> bounded f32 magnitude
    ce_acc[...] += jnp.sum(ce_rows, axis=0, keepdims=True) * jnp.float32(1.0 / n_rows)

    # ---- KD: KL( softmax(t/T) || softmax(s/T) ), folded form ----
    # sum_c p_t*(log p_t - log p_s)
    #   = (1/tt_sum) * sum_c tt_exp*(tt_shift - ss_shift) - log(tt_sum) + log_zs
    ss_shift = s_shift * inv_t                 # (s - max(s))/T == s/T - max(s/T)
    log_zs = jnp.log(jnp.sum(jnp.exp(ss_shift), axis=1, keepdims=True))
    tt = t_ref[...].astype(jnp.float32) * inv_t   # teacher read delayed to here
    tt_max = jnp.max(tt, axis=1, keepdims=True)
    tt_shift = tt - tt_max
    tt_exp = jnp.exp(tt_shift)
    tt_sum = jnp.sum(tt_exp, axis=1, keepdims=True)            # (TN, 1)
    acc = jnp.sum(tt_exp * (tt_shift - ss_shift),
                  axis=1, keepdims=True)                       # (TN, 1)
    # Per-row (TN,1) reciprocal only; exact (approx=False) is essentially free at
    # this granularity and keeps f32-tight accuracy for the correctness check.
    kd_rows = (acc * pl.reciprocal(tt_sum, approx=False)
               - jnp.log(tt_sum) + log_zs) * valid             # (TN, 1)
    kd_acc[...] += (jnp.sum(kd_rows, axis=0, keepdims=True)
                    * jnp.float32(1.0 / (n_rows * n_cols)))

    @pl.when(j == pl.num_programs(1) - 1)
    def _():
        # lane-dense (1, 8, 128) partial-sum blocks; wrapper picks element [o,0,0]
        kd_out[...] = jnp.broadcast_to(kd_acc[...], kd_out.shape)
        ce_out[...] = jnp.broadcast_to(ce_acc[...], ce_out.shape)


def _vmem_budget_bytes():
    try:
        cap = int(pltpu.get_tpu_info().vmem_capacity_bytes)
    except Exception:
        cap = 64 << 20  # assume smallest (v7x-like) VMEM if query unavailable
    # ~96 MiB on 128-MiB chips (v5e/v6e), ~48 MiB on 64-MiB chips (v7x)
    return max(16 << 20, (cap * 3) // 4)


def distillation_loss(pred_student, pred_teacher, target,
                      alpha=ALPHA, temp=TEMP, tile_n=None, input_dtype=None):
    """pred_student, pred_teacher: (N, C) float; target: (N,) integer labels.

    Pass input_dtype=jnp.bfloat16 (or feed bf16 logits) to halve HBM read
    traffic on v5e/v6e/v7x; all in-kernel math is float32 regardless.
    """
    N, C = pred_student.shape
    if input_dtype is not None:
        pred_student = pred_student.astype(input_dtype)
        pred_teacher = pred_teacher.astype(input_dtype)
    in_bytes = jnp.dtype(pred_student.dtype).itemsize

    # Class axis: pad to a 128-lane multiple with a large-negative fill so
    # max/exp/sum never see undefined lanes (padded lanes contribute exactly 0).
    c_pad = _round_up(C, 128)
    if c_pad != C:
        pred_student = jnp.pad(pred_student, ((0, 0), (0, c_pad - C)),
                               constant_values=_NEG_FILL)
        pred_teacher = jnp.pad(pred_teacher, ((0, 0), (0, c_pad - C)),
                               constant_values=_NEG_FILL)

    # Row tile from a VMEM budget: 2 logit inputs x double-buffer + ~6 f32 temps.
    budget = _vmem_budget_bytes()
    if tile_n is None:
        per_row = 2 * 2 * c_pad * in_bytes + 6 * c_pad * 4
        tile_n = max(8, min(2048, (budget // per_row) // 8 * 8))
    tile_n = max(8, _round_up(int(tile_n), 8))
    tile_n = min(tile_n, _round_up(N, 8))

    # 2-D grid: outer "parallel" (megacore on v7x) x inner "arbitrary" (reduction).
    total_tiles = -(-N // tile_n)
    n_outer = 2 if total_tiles >= 2 else 1
    n_inner = -(-total_tiles // n_outer)
    n_pad = n_outer * n_inner * tile_n
    if n_pad != N:
        pad = n_pad - N
        pred_student = jnp.pad(pred_student, ((0, pad), (0, 0)))
        pred_teacher = jnp.pad(pred_teacher, ((0, pad), (0, 0)))
        target = jnp.pad(target, ((0, pad),))
    tgt2d = target.astype(jnp.int32).reshape(n_pad, 1)

    kernel = functools.partial(_distill_kernel, temp=float(temp),
                               n_rows=N, n_cols=C, n_inner=n_inner)
    row_map = lambda o, j: (o * n_inner + j, 0)

    # TODO(synk): for vocab-scale C where even tile_n=8 rows of (tile_n, C) exceed
    # the VMEM budget (notably v7x's 64 MiB), add a class-axis grid dimension with
    # an online logsumexp (running max/sum/partial-KD/picked in (tile_n,1) scratch).
    kd_part, ce_part = pl.pallas_call(
        kernel,
        out_shape=(jax.ShapeDtypeStruct((n_outer, 8, 128), jnp.float32),
                   jax.ShapeDtypeStruct((n_outer, 8, 128), jnp.float32)),
        grid_spec=pltpu.PrefetchScalarGridSpec(
            num_scalar_prefetch=0,
            grid=(n_outer, n_inner),
            in_specs=[
                pl.BlockSpec((tile_n, c_pad), row_map),
                pl.BlockSpec((tile_n, c_pad), row_map),
                pl.BlockSpec((tile_n, 1), row_map),
            ],
            out_specs=[
                pl.BlockSpec((1, 8, 128), lambda o, j: (o, 0, 0)),
                pl.BlockSpec((1, 8, 128), lambda o, j: (o, 0, 0)),
            ],
            scratch_shapes=[pltpu.VMEM((1, 1), jnp.float32),   # kd partial (scaled)
                            pltpu.VMEM((1, 1), jnp.float32)],  # ce partial (scaled)
        ),
        compiler_params=pltpu.CompilerParams(
            dimension_semantics=("parallel", "arbitrary"),
            vmem_limit_bytes=int(budget)),
    )(pred_student, pred_teacher, tgt2d)

    kd = jnp.sum(kd_part[:, 0, 0])   # already mean over N*C
    ce = jnp.sum(ce_part[:, 0, 0])   # already mean over N
    return kd * (alpha * temp * temp) + ce * (1.0 - alpha)


def _reference(pred_student, pred_teacher, target, alpha=ALPHA, temp=TEMP):
    s = pred_student.astype(jnp.float32)
    t = pred_teacher.astype(jnp.float32)
    log_ps = jax.nn.log_softmax(s / temp, axis=1)
    p_t = jax.nn.softmax(t / temp, axis=1)
    kd = jnp.mean(p_t * (jnp.log(p_t) - log_ps))
    log_p = jax.nn.log_softmax(s, axis=1)
    ce = jnp.mean(-jnp.take_along_axis(log_p, target[:, None], axis=1))
    return kd * (alpha * temp * temp) + ce * (1.0 - alpha)


if __name__ == "__main__":
    key = jax.random.PRNGKey(0)
    k1, k2, k3 = jax.random.split(key, 3)

    # Test 1: single tile, class axis padded 32 -> 128, auto tile_n.
    N, C = 8, 32
    s1 = jax.random.normal(k1, (N, C), dtype=jnp.float32)
    t1 = jax.random.normal(k2, (N, C), dtype=jnp.float32)
    y1 = jax.random.randint(k3, (N,), 0, C, dtype=jnp.int32)
    loss1 = distillation_loss(s1, t1, y1)
    jax.block_until_ready(loss1)
    ref1 = _reference(s1, t1, y1)
    assert jnp.allclose(loss1, ref1, rtol=1e-5, atol=1e-5), (loss1, ref1)

    # Test 2: 2-D grid (parallel outer x arbitrary inner) with row padding/masking
    # (N=20, tile=8 -> grid (2, 2), 12 masked rows).
    k4, k5, k6 = jax.random.split(k1, 3)
    N2, C2 = 20, 32
    s2 = jax.random.normal(k4, (N2, C2), dtype=jnp.float32)
    t2 = jax.random.normal(k5, (N2, C2), dtype=jnp.float32)
    y2 = jax.random.randint(k6, (N2,), 0, C2, dtype=jnp.int32)
    loss2 = distillation_loss(s2, t2, y2, tile_n=8)
    jax.block_until_ready(loss2)
    ref2 = _reference(s2, t2, y2)
    assert jnp.allclose(loss2, ref2, rtol=1e-5, atol=1e-5), (loss2, ref2)

    # Test 3: bf16 input path (halves HBM read traffic; in-kernel math stays f32).
    loss3 = distillation_loss(s2, t2, y2, tile_n=8, input_dtype=jnp.bfloat16)
    jax.block_until_ready(loss3)
    ref3 = _reference(s2.astype(jnp.bfloat16), t2.astype(jnp.bfloat16), y2)
    assert jnp.allclose(loss3, ref3, rtol=1e-4, atol=1e-4), (loss3, ref3)

    print("KERNEL_OK")
</pallas_src>

<mosaic_0001>
module attributes {stable_mosaic.version = 11 : i64} {
  func.func @_distill_kernel(%arg0: i32, %arg1: i32, %arg2: memref<8x128xf32, #tpu.memory_space<vmem>>, %arg3: memref<8x128xf32, #tpu.memory_space<vmem>>, %arg4: memref<8x1xi32, #tpu.memory_space<vmem>>, %arg5: memref<1x8x128xf32, #tpu.memory_space<vmem>>, %arg6: memref<1x8x128xf32, #tpu.memory_space<vmem>>, %arg7: memref<1x1xf32, #tpu.memory_space<vmem>>, %arg8: memref<1x1xf32, #tpu.memory_space<vmem>>) attributes {dimension_semantics = [#tpu.dimension_semantics<parallel>, #tpu.dimension_semantics<arbitrary>], iteration_bounds = array<i64: 1, 1>, scalar_prefetch = 0 : i64, scratch_operands = 2 : i64, tpu.core_type = #tpu.core_type<tc>, window_params = [{transform_indices = @transform_0, window_bounds = array<i64: 8, 128>}, {transform_indices = @transform_1, window_bounds = array<i64: 8, 128>}, {transform_indices = @transform_2, window_bounds = array<i64: 8, 1>}, {transform_indices = @transform_3, window_bounds = array<i64: 1, 8, 128>}, {transform_indices = @transform_4, window_bounds = array<i64: 1, 8, 128>}]} {
    %c0_i32 = arith.constant 0 : i32
    %0 = arith.cmpi eq, %arg1, %c0_i32 : i32
    %1 = arith.extui %0 : i1 to i32
    %c0_i32_0 = arith.constant 0 : i32
    %2 = arith.cmpi ne, %1, %c0_i32_0 : i32
    scf.if %2 {
      %cst_30 = arith.constant 0.000000e+00 : f32
      %75 = vector.broadcast %cst_30 : f32 to vector<1x1xf32>
      %c0_31 = arith.constant 0 : index
      %c0_32 = arith.constant 0 : index
      %76 = vector.load %arg7[%c0_31, %c0_32] : memref<1x1xf32, #tpu.memory_space<vmem>>, vector<1x1xf32>
      tpu.vector_store %arg7[%c0_31, %c0_32], %75 {strides = array<i32>} : memref<1x1xf32, #tpu.memory_space<vmem>>, vector<1x1xf32>,
      %cst_33 = arith.constant 0.000000e+00 : f32
      %77 = vector.broadcast %cst_33 : f32 to vector<1x1xf32>
      %c0_34 = arith.constant 0 : index
      %c0_35 = arith.constant 0 : index
      %78 = vector.load %arg8[%c0_34, %c0_35] : memref<1x1xf32, #tpu.memory_space<vmem>>, vector<1x1xf32>
      tpu.vector_store %arg8[%c0_34, %c0_35], %77 {strides = array<i32>} : memref<1x1xf32, #tpu.memory_space<vmem>>, vector<1x1xf32>,
    } else {
    }
    %c0 = arith.constant 0 : index
    %c0_1 = arith.constant 0 : index
    %3 = vector.load %arg2[%c0, %c0_1] : memref<8x128xf32, #tpu.memory_space<vmem>>, vector<8x128xf32>
    %c0_2 = arith.constant 0 : index
    %c0_3 = arith.constant 0 : index
    %4 = vector.load %arg4[%c0_2, %c0_3] : memref<8x1xi32, #tpu.memory_space<vmem>>, vector<8x1xi32>
    %c1_i32 = arith.constant 1 : i32
    %5 = arith.muli %arg0, %c1_i32 : i32
    %6 = arith.addi %5, %arg1 : i32
    %c8_i32 = arith.constant 8 : i32
    %7 = arith.muli %6, %c8_i32 : i32
    %8 = tpu.iota {dimensions = array<i32: 0>} : vector<8x1xi32>
    %9 = vector.broadcast %7 : i32 to vector<8x1xi32>
    %10 = arith.addi %9, %8 : vector<8x1xi32>
    %c8_i32_4 = arith.constant 8 : i32
    %11 = vector.broadcast %c8_i32_4 : i32 to vector<8x1xi32>
    %12 = arith.cmpi slt, %10, %11 : vector<8x1xi32>
    %13 = arith.extui %12 : vector<8x1xi1> to vector<8x1xi32>
    %14 = arith.sitofp %13 : vector<8x1xi32> to vector<8x1xf32>
    %cst = arith.constant dense<0xFF800000> : vector<8xf32>
    %15 = vector.multi_reduction <maximumf>, %3, %cst [1] : vector<8x128xf32> to vector<8xf32>
    %16 = vector.shape_cast %15 : vector<8xf32> to vector<8x1xf32>
    %17 = vector.broadcast %16 : vector<8x1xf32> to vector<8x128xf32>
    %18 = arith.subf %3, %17 : vector<8x128xf32>
    %19 = math.exp %18 : vector<8x128xf32>
    %cst_5 = arith.constant dense<0.000000e+00> : vector<8xf32>
    %20 = vector.multi_reduction <add>, %19, %cst_5 [1] : vector<8x128xf32> to vector<8xf32>
    %21 = vector.shape_cast %20 : vector<8xf32> to vector<8x1xf32>
    %22 = math.log %21 : vector<8x1xf32>
    %23 = tpu.iota {dimensions = array<i32: 1>} : vector<8x128xi32>
    %24 = vector.broadcast %4 : vector<8x1xi32> to vector<8x128xi32>
    %25 = arith.cmpi eq, %23, %24 : vector<8x128xi32>
    %cst_6 = arith.constant 0.000000e+00 : f32
    %26 = vector.broadcast %cst_6 : f32 to vector<8x128xf32>
    %27 = arith.select %25, %18, %26 : vector<8x128xi1>, vector<8x128xf32>
    %cst_7 = arith.constant dense<0.000000e+00> : vector<8xf32>
    %28 = vector.multi_reduction <add>, %27, %cst_7 [1] : vector<8x128xf32> to vector<8xf32>
    %29 = vector.shape_cast %28 : vector<8xf32> to vector<8x1xf32>
    %30 = arith.subf %22, %29 : vector<8x1xf32>
    %31 = arith.mulf %30, %14 : vector<8x1xf32>
    %c0_8 = arith.constant 0 : index
    %c0_9 = arith.constant 0 : index
    %32 = vector.load %arg8[%c0_8, %c0_9] : memref<1x1xf32, #tpu.memory_space<vmem>>, vector<1x1xf32>
    %cst_10 = arith.constant dense<0.000000e+00> : vector<1xf32>
    %33 = vector.multi_reduction <add>, %31, %cst_10 [0] : vector<8x1xf32> to vector<1xf32>
    %34 = vector.shape_cast %33 : vector<1xf32> to vector<1x1xf32>
    %cst_11 = arith.constant 1.250000e-01 : f32
    %35 = vector.broadcast %cst_11 : f32 to vector<1x1xf32>
    %36 = arith.mulf %34, %35 : vector<1x1xf32>
    %37 = arith.addf %32, %36 : vector<1x1xf32>
    %c0_12 = arith.constant 0 : index
    %c0_13 = arith.constant 0 : index
    %38 = vector.load %arg8[%c0_12, %c0_13] : memref<1x1xf32, #tpu.memory_space<vmem>>, vector<1x1xf32>
    tpu.vector_store %arg8[%c0_12, %c0_13], %37 {strides = array<i32>} : memref<1x1xf32, #tpu.memory_space<vmem>>, vector<1x1xf32>,
    %cst_14 = arith.constant 0.166666672 : f32
    %39 = vector.broadcast %cst_14 : f32 to vector<8x128xf32>
    %40 = arith.mulf %18, %39 : vector<8x128xf32>
    %41 = math.exp %40 : vector<8x128xf32>
    %cst_15 = arith.constant dense<0.000000e+00> : vector<8xf32>
    %42 = vector.multi_reduction <add>, %41, %cst_15 [1] : vector<8x128xf32> to vector<8xf32>
    %43 = vector.shape_cast %42 : vector<8xf32> to vector<8x1xf32>
    %44 = math.log %43 : vector<8x1xf32>
    %c0_16 = arith.constant 0 : index
    %c0_17 = arith.constant 0 : index
    %45 = vector.load %arg3[%c0_16, %c0_17] : memref<8x128xf32, #tpu.memory_space<vmem>>, vector<8x128xf32>
    %cst_18 = arith.constant 0.166666672 : f32
    %46 = vector.broadcast %cst_18 : f32 to vector<8x128xf32>
    %47 = arith.mulf %45, %46 : vector<8x128xf32>
    %cst_19 = arith.constant dense<0xFF800000> : vector<8xf32>
    %48 = vector.multi_reduction <maximumf>, %47, %cst_19 [1] : vector<8x128xf32> to vector<8xf32>
    %49 = vector.shape_cast %48 : vector<8xf32> to vector<8x1xf32>
    %50 = vector.broadcast %49 : vector<8x1xf32> to vector<8x128xf32>
    %51 = arith.subf %47, %50 : vector<8x128xf32>
    %52 = math.exp %51 : vector<8x128xf32>
    %cst_20 = arith.constant dense<0.000000e+00> : vector<8xf32>
    %53 = vector.multi_reduction <add>, %52, %cst_20 [1] : vector<8x128xf32> to vector<8xf32>
    %54 = vector.shape_cast %53 : vector<8xf32> to vector<8x1xf32>
    %55 = arith.subf %51, %40 : vector<8x128xf32>
    %56 = arith.mulf %52, %55 : vector<8x128xf32>
    %cst_21 = arith.constant dense<0.000000e+00> : vector<8xf32>
    %57 = vector.multi_reduction <add>, %56, %cst_21 [1] : vector<8x128xf32> to vector<8xf32>
    %58 = vector.shape_cast %57 : vector<8xf32> to vector<8x1xf32>
    %59 = tpu.reciprocal %54 : vector<8x1xf32> -> vector<8x1xf32>
    %60 = arith.mulf %58, %59 : vector<8x1xf32>
    %61 = math.log %54 : vector<8x1xf32>
    %62 = arith.subf %60, %61 : vector<8x1xf32>
    %63 = arith.addf %62, %44 : vector<8x1xf32>
    %64 = arith.mulf %63, %14 : vector<8x1xf32>
    %c0_22 = arith.constant 0 : index
    %c0_23 = arith.constant 0 : index
    %65 = vector.load %arg7[%c0_22, %c0_23] : memref<1x1xf32, #tpu.memory_space<vmem>>, vector<1x1xf32>
    %cst_24 = arith.constant dense<0.000000e+00> : vector<1xf32>
    %66 = vector.multi_reduction <add>, %64, %cst_24 [0] : vector<8x1xf32> to vector<1xf32>
    %67 = vector.shape_cast %66 : vector<1xf32> to vector<1x1xf32>
    %cst_25 = arith.constant 3.906250e-03 : f32
    %68 = vector.broadcast %cst_25 : f32 to vector<1x1xf32>
    %69 = arith.mulf %67, %68 : vector<1x1xf32>
    %70 = arith.addf %65, %69 : vector<1x1xf32>
    %c0_26 = arith.constant 0 : index
    %c0_27 = arith.constant 0 : index
    %71 = vector.load %arg7[%c0_26, %c0_27] : memref<1x1xf32, #tpu.memory_space<vmem>>, vector<1x1xf32>
    tpu.vector_store %arg7[%c0_26, %c0_27], %70 {strides = array<i32>} : memref<1x1xf32, #tpu.memory_space<vmem>>, vector<1x1xf32>,
    %c0_i32_28 = arith.constant 0 : i32
    %72 = arith.cmpi eq, %arg1, %c0_i32_28 : i32
    %73 = arith.extui %72 : i1 to i32
    %c0_i32_29 = arith.constant 0 : i32
    %74 = arith.cmpi ne, %73, %c0_i32_29 : i32
    scf.if %74 {
      %c0_30 = arith.constant 0 : index
      %c0_31 = arith.constant 0 : index
      %75 = vector.load %arg7[%c0_30, %c0_31] : memref<1x1xf32, #tpu.memory_space<vmem>>, vector<1x1xf32>
      %76 = vector.shape_cast %75 : vector<1x1xf32> to vector<1x1x1xf32>
      %77 = vector.broadcast %76 : vector<1x1x1xf32> to vector<1x8x128xf32>
      %c0_32 = arith.constant 0 : index
      %c0_33 = arith.constant 0 : index
      %c0_34 = arith.constant 0 : index
      %78 = vector.load %arg5[%c0_32, %c0_33, %c0_34] : memref<1x8x128xf32, #tpu.memory_space<vmem>>, vector<1x8x128xf32>
      tpu.vector_store %arg5[%c0_32, %c0_33, %c0_34], %77 {strides = array<i32>} : memref<1x8x128xf32, #tpu.memory_space<vmem>>, vector<1x8x128xf32>,
      %c0_35 = arith.constant 0 : index
      %c0_36 = arith.constant 0 : index
      %79 = vector.load %arg8[%c0_35, %c0_36] : memref<1x1xf32, #tpu.memory_space<vmem>>, vector<1x1xf32>
      %80 = vector.shape_cast %79 : vector<1x1xf32> to vector<1x1x1xf32>
      %81 = vector.broadcast %80 : vector<1x1x1xf32> to vector<1x8x128xf32>
      %c0_37 = arith.constant 0 : index
      %c0_38 = arith.constant 0 : index
      %c0_39 = arith.constant 0 : index
      %82 = vector.load %arg6[%c0_37, %c0_38, %c0_39] : memref<1x8x128xf32, #tpu.memory_space<vmem>>, vector<1x8x128xf32>
      tpu.vector_store %arg6[%c0_37, %c0_38, %c0_39], %81 {strides = array<i32>} : memref<1x8x128xf32, #tpu.memory_space<vmem>>, vector<1x8x128xf32>,
    } else {
    }
    return
  }
  func.func @transform_0(%arg0: i32, %arg1: i32) -> (i32, i32) {
    %c1_i32 = arith.constant 1 : i32
    %0 = arith.muli %arg0, %c1_i32 : i32
    %1 = arith.addi %0, %arg1 : i32
    %c0_i32 = arith.constant 0 : i32
    %c0_i32_0 = arith.constant 0 : i32
    return %1, %c0_i32 : i32, i32
  }
  func.func @transform_1(%arg0: i32, %arg1: i32) -> (i32, i32) {
    %c1_i32 = arith.constant 1 : i32
    %0 = arith.muli %arg0, %c1_i32 : i32
    %1 = arith.addi %0, %arg1 : i32
    %c0_i32 = arith.constant 0 : i32
    %c0_i32_0 = arith.constant 0 : i32
    return %1, %c0_i32 : i32, i32
  }
  func.func @transform_2(%arg0: i32, %arg1: i32) -> (i32, i32) {
    %c1_i32 = arith.constant 1 : i32
    %0 = arith.muli %arg0, %c1_i32 : i32
    %1 = arith.addi %0, %arg1 : i32
    %c0_i32 = arith.constant 0 : i32
    %c0_i32_0 = arith.constant 0 : i32
    return %1, %c0_i32 : i32, i32
  }
  func.func @transform_3(%arg0: i32, %arg1: i32) -> (i32, i32, i32) {
    %c0_i32 = arith.constant 0 : i32
    %c0_i32_0 = arith.constant 0 : i32
    %c0_i32_1 = arith.constant 0 : i32
    return %arg0, %c0_i32, %c0_i32_0 : i32, i32, i32
  }
  func.func @transform_4(%arg0: i32, %arg1: i32) -> (i32, i32, i32) {
    %c0_i32 = arith.constant 0 : i32
    %c0_i32_0 = arith.constant 0 : i32
    %c0_i32_1 = arith.constant 0 : i32
    return %arg0, %c0_i32, %c0_i32_0 : i32, i32, i32
  }
}

</mosaic_0001>

<llo_original>
// kernel: tpu_custom_call.1
$region0: #{tpu_custom_call.1}
  #allocation0 [shape = 'u32[]', space=smem, size = 0x4, offset = 0x4, fixed_abs, tag = 'smem constant byte address 0x4 - core index']
  #allocation1 [shape = 'u32[72,128]{1,0:T(1,128)}', space=vmem, size = 0x9000, scoped, tag = 'internal scratch']
  #allocation2 [shape = 'f32[1,1]{1,0:T(1,128)}', space=vmem, size = 0x200, scoped, tag = 'scratch operand']
  #allocation3 [shape = 'f32[1,1]{1,0:T(1,128)}', space=vmem, size = 0x200, scoped, tag = 'scratch operand']
  %s0 = inlined_call_operand.vmem [shape: f32[8,128], index: 0, kind: input, shape index: {}]
  %s1 = inlined_call_operand.hbm [shape: f32[8,128], index: 1, kind: input, shape index: {}]
  %s2 = inlined_call_operand.vmem [shape: s32[8,1], index: 2, kind: input, shape index: {}]
  %s3 = inlined_call_operand.hbm [shape: f32[1,8,128], index: 3, kind: output, shape index: {0}]
  %s4 = inlined_call_operand.hbm [shape: f32[1,8,128], index: 4, kind: output, shape index: {1}]
  %5 = xla_tuple %s3, %s4
  %s6 = sld [smem:[#allocation0]]
  $region42: #{tpu_custom_call.1} parent=0
    _
  %s8 = ssub.s32 1, %s6
  %s9 = scalar_select 0, %s8, %s6
  $region1: #{tpu_custom_call.1} parent=0
    #allocation4 [shape = 'u8[4096]{0}', space=vmem, size = 0x1000, scoped, tag = 'input window, operand 1, single buffered']
    #allocation5 [shape = 's32[1]{0}', space=sflag, size = 0x4, scoped, tag = 'scoped memory for tpu_custom_call.1']
    #allocation6 [shape = 's32[1]{0}', space=sflag, size = 0x4, scoped, tag = 'scoped memory for tpu_custom_call.1']
    #allocation7 [shape = 'u8[4096]{0}', space=vmem, size = 0x1000, scoped, tag = 'output window, operand 0, single buffered']
    #allocation8 [shape = 'u8[4096]{0}', space=vmem, size = 0x1000, scoped, tag = 'output window, operand 1, single buffered']
    #allocation9 [shape = 's32[1]{0}', space=sflag, size = 0x4, scoped, tag = 'scoped memory for tpu_custom_call.1']
    %10 = vsyncpa [#allocation5], 0
    %11 = vsyncpa [#allocation6], 0
    %12 = vsyncpa [#allocation9], 0
    // Predicated region
    $region2: #{tpu_custom_call.1} parent=1 // pred_check
      _
    $region3: #{tpu_custom_call.1} parent=1 // pred_check_branch
      %14 = sbr.rel (0) target = $region5
    $region4: #{tpu_custom_call.1} parent=1 // pred_region
      %s15 = sadd.s32 0, 0
      %p16 = scmp.lt.s32.totalorder %s15, 0
      %s17 = scalar_select %p16, %s15, 0
      %s18 = smul.addr %s17, 8
      %s19 = scalar_lea.vmem %s0, %s18
      %s20 = sadd.s32 0, 0
    $region5: #{tpu_custom_call.1} parent=1 // pred_fallthru
      _
    // Predicated region
    $region6: #{tpu_custom_call.1} parent=1 // pred_check
      _
    $region7: #{tpu_custom_call.1} parent=1 // pred_check_branch
      %22 = sbr.rel (0) target = $region9
    $region8: #{tpu_custom_call.1} parent=1 // pred_region
      %s23 = sadd.s32 0, 0
      %25 = vsyncadd [#allocation5], 0
      %s26 = smul.addr %s23, 8
      %s27 = scalar_lea.hbm %s1, %s26
      %s29 = sshll.u32 %s27, 4
      %s30 = int_to_ptr.hbm [resolvable:$true] %s29
      %s31 = sshll.u32 [#allocation4], 4
      %s32 = int_to_ptr.vmem [resolvable:$true] %s31
      %34 = dma.hbm_to_vmem [thread:$0]  %s30, 128, %s32, [#allocation5]
    $region9: #{tpu_custom_call.1} parent=1 // pred_fallthru
      _
    // Predicated region
    $region10: #{tpu_custom_call.1} parent=1 // pred_check
      _
    $region11: #{tpu_custom_call.1} parent=1 // pred_check_branch
      %36 = sbr.rel (0) target = $region13
    $region12: #{tpu_custom_call.1} parent=1 // pred_region
      %s37 = sadd.s32 0, 0
      %p38 = scmp.lt.s32.totalorder %s37, 0
      %s39 = scalar_select %p38, %s37, 0
      %s40 = smul.addr %s39, 8
      %s41 = scalar_lea.vmem %s2, %s40
      %s42 = sadd.s32 0, 0
    $region13: #{tpu_custom_call.1} parent=1 // pred_fallthru
      _
    // Predicated region
    $region14: #{tpu_custom_call.1} parent=1 // pred_check
      _
    $region15: #{tpu_custom_call.1} parent=1 // pred_check_branch
      %44 = sbr.rel (0) target = $region17
    $region16: #{tpu_custom_call.1} parent=1 // pred_region
      %46 = dma.done [#allocation5], 128
    $region17: #{tpu_custom_call.1} parent=1 // pred_fallthru
      _
    %s47 = sadd.s32 0, 0
    %p48 = scmp.lt.s32.totalorder %s47, 0
    %s49 = scalar_select %p48, %s47, 0
    %s50 = smul.addr %s49, 8
    %s51 = scalar_lea.vmem %s0, %s50
    %s52 = sadd.s32 0, 0
    %p53 = scmp.lt.s32.totalorder %s52, 0
    %s54 = scalar_select %p53, %s52, 0
    %s55 = smul.addr %s54, 8
    %s56 = scalar_lea.vmem %s2, %s55
    %s57 = sadd.s32 0, 0
    %p58 = scmp.lt.s32.totalorder %s57, 0
    %s59 = scalar_select %p58, %s57, 0
    %s60 = smul.addr %s59, 8
    %s61 = scalar_lea.vmem %s0, %s60
    %s62 = sadd.s32 0, 0
    %s63 = sadd.s32 0, 0
    %s64 = sadd.s32 0, 0
    %p65 = scmp.lt.s32.totalorder %s64, 0
    %s66 = scalar_select %p65, %s64, 0
    %s67 = smul.addr %s66, 8
    %s68 = scalar_lea.vmem %s2, %s67
    %s69 = sadd.s32 0, 0
    %p70 = scmp.eq.s32.totalorder 0, 0
    // Predicated region
    $region18: #{tpu_custom_call.1} parent=1 // pred_check
      %p71 = pneg %p70
    $region19: #{tpu_custom_call.1} parent=1 // pred_check_branch
      %73 = sbr.rel (%p71) target = $region21
    $region20: #{tpu_custom_call.1} parent=1 // pred_region
      %vm74 = vcmask 0
      %75 = vst.msk [vmem:[#allocation2] sm:$0x1] %vm74, 0.0
      %76 = vst.msk [vmem:[#allocation3] sm:$0x1] %vm74, 0.0
    $region21: #{tpu_custom_call.1} parent=1 // pred_fallthru
      _
    %v77 = vld [vmem:[%s61] sm:$0xff]
    %v78 = vld [vmem:[%s68] sm:$0xff]
    %s79 = sadd.s32 0, 0
    %s80 = smul.u32 %s79, 8
    %v81 = vlaneseq
    %v82 = vshrl.u32 %v81, 7
    %v83 = vstv %s80
    %v84 = vadd.s32 %v83, %v82
    %vm85 = vcmp.lt.s32.totalorder %v84, 8
    %v86 = vsel %vm85, 1, 0
    %v87 = vcvt.s32.f32 %v86
    %88 = vmax.xlane.f32.xlu0 %v77
    %v89 = vpop.xlane.xlu0 %88
    %v90 = vsub.f32 %v77, %v89
    %v91 = vmul.f32 %v90, 1.442695
    %v92 = vpow.pop %v91
    %93 = vadd.xlane.f32.xlu0 %v92
    %v94 = vpop.xlane.xlu0 %93
    %v95 = vlog2.pop %v94
    %v96 = vmul.f32 %v95, 0.6931472
    %v97 = vlaneseq
    %v98 = vand.u32 %v97, 127
    %99 = vset.pattern.permute.xlu0 0
    %100 = vperm.xlu0 %99, %v78
    %v101 = vpop.permute.xlu0 %100
    %vm102 = vcmp.eq.s32.totalorder %v98, %v101
    %v103 = vsel %vm102, %v90, 0.0
    %104 = vadd.xlane.f32.xlu0 %v103
    %v105 = vpop.xlane.xlu0 %104
    %v106 = vsub.f32 %v96, %v105
    %v107 = vmul.f32 %v106, %v87
    %v108 = vld [vmem:[#allocation3] sm:$0x1]
    %v109 = vrot.slane %v107, 4
    %v110 = vadd.f32 %v107, %v109
    %v111 = vrot.slane %v110, 2
    %v112 = vadd.f32 %v110, %v111
    %v113 = vrot.slane %v112, 1
    %v114 = vadd.f32 %v112, %v113
    %v115 = vmul.f32 %v114, 0.125
    %v116 = vadd.f32 %v108, %v115
    %vm117 = vcmask 0
    %118 = vst.msk [vmem:[#allocation3] sm:$0x1] %vm117, %v116
    %v119 = vmul.f32 %v90, 0.16666667
    %v120 = vmul.f32 %v119, 1.442695
    %v121 = vpow.pop %v120
    %122 = vadd.xlane.f32.xlu0 %v121
    %v123 = vpop.xlane.xlu0 %122
    %v124 = vlog2.pop %v123
    %v125 = vmul.f32 %v124, 0.6931472
    %v126 = vld [vmem:[#allocation4] sm:$0xff]
    %v127 = vmul.f32 %v126, 0.16666667
    %128 = vmax.xlane.f32.xlu0 %v127
    %v129 = vpop.xlane.xlu0 %128
    %v130 = vsub.f32 %v127, %v129
    %v131 = vmul.f32 %v130, 1.442695
    %v132 = vpow.pop %v131
    %133 = vadd.xlane.f32.xlu0 %v132
    %v134 = vpop.xlane.xlu0 %133
    %v135 = vsub.f32 %v130, %v119
    %v136 = vmul.f32 %v132, %v135
    %137 = vadd.xlane.f32.xlu0 %v136
    %v138 = vpop.xlane.xlu0 %137
    %v139 = vrcp.pop %v134
    %v140 = vmul.f32 %v134, %v139
    %v141 = vsub.f32 1.0, %v140
    %v142 = vmul.f32 %v139, %v141
    %v143 = vadd.f32 %v139, %v142
    %vm144 = vweird.f32 %v134
    %vm145 = vweird.f32 %v139
    %vm146 = vmor %vm144, %vm145
    %v147 = vsel %vm146, %v139, %v143
    %v148 = vand.u32 2147483647, %v134
    %vm149 = vcmp.eq.f32.partialorder %v148, 8.507059e+37
    %v150 = vand.u32 %v134, 2147483648
    %v151 = vor.u32 1.1754944e-38, %v150
    %v152 = vsel %vm149, %v151, %v147
    %v153 = vmul.f32 %v138, %v152
    %v154 = vlog2.pop %v134
    %v155 = vmul.f32 %v154, 0.6931472
    %v156 = vsub.f32 %v153, %v155
    %v157 = vadd.f32 %v156, %v125
    %v158 = vmul.f32 %v157, %v87
    %v159 = vld [vmem:[#allocation2] sm:$0x1]
    %v160 = vrot.slane %v158, 4
    %v161 = vadd.f32 %v158, %v160
    %v162 = vrot.slane %v161, 2
    %v163 = vadd.f32 %v161, %v162
    %v164 = vrot.slane %v163, 1
    %v165 = vadd.f32 %v163, %v164
    %v166 = vmul.f32 %v165, 0.00390625
    %v167 = vadd.f32 %v159, %v166
    %168 = vst.msk [vmem:[#allocation2] sm:$0x1] %vm117, %v167
    // Predicated region
    $region22: #{tpu_custom_call.1} parent=1 // pred_check
      %p169 = pneg %p70
    $region23: #{tpu_custom_call.1} parent=1 // pred_check_branch
      %171 = sbr.rel (%p169) target = $region25
    $region24: #{tpu_custom_call.1} parent=1 // pred_region
      %v172 = vld [vmem:[#allocation2] sm:$0x1]
      %v174 = vperm.slane %v172, 0
      %175 = vset.pattern.permute.xlu0 0
      %176 = vperm.xlu0 %175, %v174
      %v177 = vpop.permute.xlu0 %176
      %179 = vst [vmem:[#allocation7] sm:$0xff] %v177
      %v180 = vld [vmem:[#allocation3] sm:$0x1]
      %v182 = vperm.slane %v180, 0
      %183 = vset.pattern.permute.xlu0 0
      %184 = vperm.xlu0 %183, %v182
      %v185 = vpop.permute.xlu0 %184
      %187 = vst [vmem:[#allocation8] sm:$0xff] %v185
    $region25: #{tpu_custom_call.1} parent=1 // pred_fallthru
      _
    // Predicated region
    $region26: #{tpu_custom_call.1} parent=1 // pred_check
      _
    $region27: #{tpu_custom_call.1} parent=1 // pred_check_branch
      %189 = sbr.rel (0) target = $region29
    $region28: #{tpu_custom_call.1} parent=1 // pred_region
      %191 = vsyncadd [#allocation6], 0
      %s193 = sshll.u32 [#allocation7], 4
      %s194 = int_to_ptr.vmem [resolvable:$true] %s193
      %s195 = sshll.u32 %s3, 4
      %s196 = int_to_ptr.hbm [resolvable:$true] %s195
      %198 = dma.vmem_to_hbm [thread:$0]  %s194, 128, %s196, [#allocation6]
    $region29: #{tpu_custom_call.1} parent=1 // pred_fallthru
      _
    // Predicated region
    $region30: #{tpu_custom_call.1} parent=1 // pred_check
      _
    $region31: #{tpu_custom_call.1} parent=1 // pred_check_branch
      %200 = sbr.rel (0) target = $region33
    $region32: #{tpu_custom_call.1} parent=1 // pred_region
      %202 = vsyncadd [#allocation9], 0
      %s204 = sshll.u32 [#allocation8], 4
      %s205 = int_to_ptr.vmem [resolvable:$true] %s204
      %s206 = sshll.u32 %s4, 4
      %s207 = int_to_ptr.hbm [resolvable:$true] %s206
      %209 = dma.vmem_to_hbm [thread:$0]  %s205, 128, %s207, [#allocation9]
    $region33: #{tpu_custom_call.1} parent=1 // pred_fallthru
      _
    // Predicated region
    $region34: #{tpu_custom_call.1} parent=1 // pred_check
      _
    $region35: #{tpu_custom_call.1} parent=1 // pred_check_branch
      %211 = sbr.rel (0) target = $region37
    $region36: #{tpu_custom_call.1} parent=1 // pred_region
      %213 = dma.done [#allocation6], 128
    $region37: #{tpu_custom_call.1} parent=1 // pred_fallthru
      _
    // Predicated region
    $region38: #{tpu_custom_call.1} parent=1 // pred_check
      _
    $region39: #{tpu_custom_call.1} parent=1 // pred_check_branch
      %215 = sbr.rel (0) target = $region41
    $region40: #{tpu_custom_call.1} parent=1 // pred_region
      %217 = dma.done [#allocation9], 128
    $region41: #{tpu_custom_call.1} parent=1 // pred_fallthru
      _
    %218 = vsyncpa [#allocation5], 1
    %219 = vsyncpa [#allocation6], 1
    %220 = vsyncpa [#allocation9], 1

</llo_original>
